<compile_context>
chip_gen: v5e
topology: v5e:2x2
jax: 0.10.0
libtpu: 0.0.40
codegen_flags: <defaults>
</compile_context>

<pallas_src>
import functools
import math

import jax
import jax.numpy as jnp
from jax.experimental import pallas as pl
from jax.experimental.pallas import tpu as pltpu

_LANES = 128                     # vreg lane width
_ROW_ALIGN = 32                  # sublane alignment safe for f32 / bf16 / int8 blocks
_CHUNK_ROWS = 512                # streaming sub-chunk inside a block
_TARGET_BLOCK_BYTES_CAP = 8 << 20  # never ask for more than 8 MiB per input block


def _vmem_capacity_bytes():
    """Physical per-core VMEM bytes; conservative 64 MiB (v7x) fallback."""
    try:
        cap = getattr(pltpu.get_tpu_info(), "vmem_capacity_bytes", None)
        if cap:
            return int(cap)
    except Exception:
        pass
    return 64 << 20


def _mse_partial_kernel(s_ref, t_ref, out_ref, *, valid_rows, row_tile, chunk_rows):
    """Per-block partial sum of squared differences, reduced to a (1, 128) vector."""
    num_chunks = row_tile // chunk_rows

    def block_sum(masked):
        def body(j, acc):
            r0 = pl.multiple_of(j * chunk_rows, chunk_rows)
            # Cast inside the kernel so HBM traffic stays in the input dtype
            # (e.g. bf16) while subtract/square/accumulate happen in f32.
            s = s_ref[pl.ds(r0, chunk_rows), :].astype(jnp.float32)
            t = t_ref[pl.ds(r0, chunk_rows), :].astype(jnp.float32)
            d = s - t
            sq = d * d
            if masked:
                # Only the last (ragged) grid block runs this path.
                row = (pl.program_id(0) * row_tile + r0
                       + jax.lax.broadcasted_iota(jnp.int32, sq.shape, 0))
                sq = jnp.where(row < valid_rows, sq, 0.0)
            # (chunk,128) -> (chunk//8, 8, 128) is vreg-aligned, so the axis-0 sum
            # is pure VALU vreg adds (no cross-sublane XLU traffic).
            return acc + jnp.sum(sq.reshape(chunk_rows // 8, 8, _LANES), axis=0)

        acc0 = jnp.zeros((8, _LANES), jnp.float32)
        acc = jax.lax.fori_loop(0, num_chunks, body, acc0,
                                unroll=(num_chunks <= 8))
        # Single tiny intra-vreg sublane reduce at the end of the block.
        return jnp.sum(acc, axis=0, keepdims=True)

    if valid_rows % row_tile != 0:
        is_last = pl.program_id(0) == pl.num_programs(0) - 1

        @pl.when(is_last)
        def _():
            out_ref[...] = block_sum(masked=True)

        @pl.when(jnp.logical_not(is_last))
        def _():
            out_ref[...] = block_sum(masked=False)
    else:
        out_ref[...] = block_sum(masked=False)


@jax.jit
def hint_loss(f_s, f_t):
    """MSELoss(f_s, f_t) = mean((f_s - f_t)^2) over all elements (reduction='mean')."""
    assert f_s.shape == f_t.shape, "HintLoss expects matching student/teacher shapes"
    n_elems = math.prod(f_s.shape)

    # Free (contiguous) flatten.
    s = f_s.reshape(-1)
    t = f_t.reshape(-1)

    # Handle a <128-element remainder in plain XLA (rare path) instead of padding
    # and copying both full arrays.
    rem = n_elems % _LANES
    main = n_elems - rem
    extra = jnp.float32(0.0)
    if rem:
        d_tail = s[main:].astype(jnp.float32) - t[main:].astype(jnp.float32)
        extra = jnp.sum(d_tail * d_tail)
        s = s[:main]
        t = t[:main]

    if main == 0:
        # Entire input fits in the remainder; nothing for the kernel to do.
        return extra / jnp.float32(n_elems)

    rows = main // _LANES
    if rows < _ROW_ALIGN:
        # Tiny-input guard: round up to a single aligned tile (cheap, few KiB;
        # zero padding contributes 0 to the squared-diff sum).
        pad_rows = _ROW_ALIGN - rows
        s = jnp.pad(s, (0, pad_rows * _LANES))
        t = jnp.pad(t, (0, pad_rows * _LANES))
        rows = _ROW_ALIGN

    s2 = s.reshape(rows, _LANES)
    t2 = t.reshape(rows, _LANES)

    # Generation- and dtype-aware block sizing: ~1/16 of physical VMEM per input
    # block (capped at 8 MiB) => 2 inputs x 2 pipeline buffers use <= 1/4 of VMEM.
    itemsize = max(jnp.dtype(f_s.dtype).itemsize, jnp.dtype(f_t.dtype).itemsize)
    vmem_cap = _vmem_capacity_bytes()
    target_block_bytes = min(_TARGET_BLOCK_BYTES_CAP, vmem_cap // 16)
    row_tile = max(_ROW_ALIGN, target_block_bytes // (_LANES * itemsize))
    row_tile = min(row_tile, rows)
    if row_tile >= _CHUNK_ROWS:
        row_tile = (row_tile // _CHUNK_ROWS) * _CHUNK_ROWS
        chunk_rows = _CHUNK_ROWS
    else:
        row_tile = (row_tile // _ROW_ALIGN) * _ROW_ALIGN
        chunk_rows = row_tile

    num_blocks = pl.cdiv(rows, row_tile)

    # Raise the scoped VMEM limit so the double-buffered input blocks fit on
    # every generation (v5e default is only 16 MiB); keep headroom and stay well
    # under the physical capacity.
    block_bytes = row_tile * _LANES * itemsize
    vmem_limit = max(32 << 20, 4 * block_bytes + (8 << 20))
    vmem_limit = min(vmem_limit, (vmem_cap * 3) // 4)

    kernel = functools.partial(_mse_partial_kernel, valid_rows=rows,
                               row_tile=row_tile, chunk_rows=chunk_rows)

    partials = pl.pallas_call(
        kernel,
        out_shape=jax.ShapeDtypeStruct((num_blocks, _LANES), jnp.float32),
        grid=(num_blocks,),
        in_specs=[
            pl.BlockSpec((row_tile, _LANES), lambda i: (i, 0)),
            pl.BlockSpec((row_tile, _LANES), lambda i: (i, 0)),
        ],
        out_specs=pl.BlockSpec((1, _LANES), lambda i: (i, 0)),
        compiler_params=pltpu.CompilerParams(
            # Independent partial reductions -> shardable across the two
            # TensorCores on v7x; harmless on single-TC v5e/v6e.
            dimension_semantics=("parallel",),
            vmem_limit_bytes=int(vmem_limit),
        ),
    )(s2, t2)

    # Tiny cross-block + cross-lane finish in plain XLA, then divide by the
    # ORIGINAL element count (all padding contributed zeros).
    return (jnp.sum(partials) + extra) / jnp.float32(n_elems)


if __name__ == "__main__":
    key = jax.random.PRNGKey(0)
    k1, k2 = jax.random.split(key)
    # Small NCHW-like feature maps: batch=2, channels=4, spatial=16x16.
    f_s = jax.random.normal(k1, (2, 4, 16, 16), dtype=jnp.float32)
    f_t = jax.random.normal(k2, (2, 4, 16, 16), dtype=jnp.float32)

    loss = hint_loss(f_s, f_t)
    jax.block_until_ready(loss)

    # Reference check against plain-JAX MSE.
    ref = jnp.mean((f_s - f_t) ** 2)
    assert jnp.allclose(loss, ref, rtol=1e-5, atol=1e-6), (loss, ref)

    print("KERNEL_OK")
</pallas_src>

<mosaic_0001>
module attributes {stable_mosaic.version = 11 : i64} {
  func.func @_mse_partial_kernel(%arg0: i32, %arg1: memref<32x128xf32, #tpu.memory_space<vmem>>, %arg2: memref<32x128xf32, #tpu.memory_space<vmem>>, %arg3: memref<1x128xf32, #tpu.memory_space<vmem>>) attributes {dimension_semantics = [#tpu.dimension_semantics<parallel>], iteration_bounds = array<i64: 1>, scalar_prefetch = 0 : i64, scratch_operands = 0 : i64, tpu.core_type = #tpu.core_type<tc>, window_params = [{transform_indices = @transform_0, window_bounds = array<i64: 32, 128>}, {transform_indices = @transform_1, window_bounds = array<i64: 32, 128>}, {transform_indices = @transform_2, window_bounds = array<i64: 1, 128>}]} {
    %cst = arith.constant 0.000000e+00 : f32
    %0 = vector.broadcast %cst : f32 to vector<8x128xf32>
    %c0_i32 = arith.constant 0 : i32
    %c32_i32 = arith.constant 32 : i32
    %1 = arith.muli %c0_i32, %c32_i32 : i32
    %2 = tpu.assume_multiple %1, 32 : i32
    %3 = arith.index_cast %2 : i32 to index
    %c0 = arith.constant 0 : index
    %4 = vector.load %arg1[%3, %c0] : memref<32x128xf32, #tpu.memory_space<vmem>>, vector<32x128xf32>
    %5 = arith.index_cast %2 : i32 to index
    %c0_0 = arith.constant 0 : index
    %6 = vector.load %arg2[%5, %c0_0] : memref<32x128xf32, #tpu.memory_space<vmem>>, vector<32x128xf32>
    %7 = arith.subf %4, %6 : vector<32x128xf32>
    %8 = arith.mulf %7, %7 : vector<32x128xf32>
    %9 = vector.shape_cast %8 : vector<32x128xf32> to vector<4x8x128xf32>
    %cst_1 = arith.constant dense<0.000000e+00> : vector<8x128xf32>
    %10 = vector.multi_reduction <add>, %9, %cst_1 [0] : vector<4x8x128xf32> to vector<8x128xf32>
    %11 = arith.addf %0, %10 : vector<8x128xf32>
    %c1_i32 = arith.constant 1 : i32
    %cst_2 = arith.constant dense<0.000000e+00> : vector<128xf32>
    %12 = vector.multi_reduction <add>, %11, %cst_2 [0] : vector<8x128xf32> to vector<128xf32>
    %13 = vector.shape_cast %12 : vector<128xf32> to vector<1x128xf32>
    %c0_3 = arith.constant 0 : index
    %c0_4 = arith.constant 0 : index
    %14 = vector.load %arg3[%c0_3, %c0_4] : memref<1x128xf32, #tpu.memory_space<vmem>>, vector<1x128xf32>
    tpu.vector_store %arg3[%c0_3, %c0_4], %13 {strides = array<i32>} : memref<1x128xf32, #tpu.memory_space<vmem>>, vector<1x128xf32>,
    return
  }
  func.func @transform_0(%arg0: i32) -> (i32, i32) {
    %c0_i32 = arith.constant 0 : i32
    %c0_i32_0 = arith.constant 0 : i32
    return %arg0, %c0_i32 : i32, i32
  }
  func.func @transform_1(%arg0: i32) -> (i32, i32) {
    %c0_i32 = arith.constant 0 : i32
    %c0_i32_0 = arith.constant 0 : i32
    return %arg0, %c0_i32 : i32, i32
  }
  func.func @transform_2(%arg0: i32) -> (i32, i32) {
    %c0_i32 = arith.constant 0 : i32
    %c0_i32_0 = arith.constant 0 : i32
    return %arg0, %c0_i32 : i32, i32
  }
}

</mosaic_0001>

<llo_original>
// kernel: hint_loss.1
$region0: #{hint_loss.1}
  #allocation0 [shape = 'u32[]', space=smem, size = 0x4, offset = 0x4, fixed_abs, tag = 'smem constant byte address 0x4 - core index']
  #allocation1 [shape = 'u32[72,128]{1,0:T(1,128)}', space=vmem, size = 0x9000, scoped, tag = 'internal scratch']
  %s0 = inlined_call_operand.vmem [shape: f32[32,128], index: 0, kind: input, shape index: {}]
  %s1 = inlined_call_operand.vmem [shape: f32[32,128], index: 1, kind: input, shape index: {}]
  %s2 = inlined_call_operand.vmem [shape: f32[1,128], index: 2, kind: output, shape index: {}]
  %s3 = sld [smem:[#allocation0]]
  $region18: #{hint_loss.1} parent=0
    _
  %s5 = ssub.s32 1, %s3
  %s6 = scalar_select 0, %s5, %s3
  // Predicated region
  $region2: #{hint_loss.1} parent=0 // pred_check
    _
  $region3: #{hint_loss.1} parent=0 // pred_check_branch
    %8 = sbr.rel (0) target = $region5
  $region4: #{hint_loss.1} parent=0 // pred_region
    _
  $region5: #{hint_loss.1} parent=0 // pred_fallthru
    _
  // Predicated region
  $region6: #{hint_loss.1} parent=0 // pred_check
    _
  $region7: #{hint_loss.1} parent=0 // pred_check_branch
    %10 = sbr.rel (0) target = $region9
  $region8: #{hint_loss.1} parent=0 // pred_region
    _
  $region9: #{hint_loss.1} parent=0 // pred_fallthru
    _
  %v11 = vld [vmem:[%s0] sm:$0xff]
  %v12 = vld [vmem:[%s0 + $0x8] sm:$0xff]
  %v13 = vld [vmem:[%s0 + $0x10] sm:$0xff]
  %v14 = vld [vmem:[%s0 + $0x18] sm:$0xff]
  %v15 = vld [vmem:[%s1] sm:$0xff]
  %v16 = vld [vmem:[%s1 + $0x8] sm:$0xff]
  %v17 = vld [vmem:[%s1 + $0x10] sm:$0xff]
  %v18 = vld [vmem:[%s1 + $0x18] sm:$0xff]
  %v19 = vsub.f32 %v11, %v15
  %v20 = vsub.f32 %v12, %v16
  %v21 = vsub.f32 %v13, %v17
  %v22 = vsub.f32 %v14, %v18
  %v23 = vmul.f32 %v19, %v19
  %v24 = vmul.f32 %v20, %v20
  %v25 = vmul.f32 %v21, %v21
  %v26 = vmul.f32 %v22, %v22
  %v27 = vadd.f32 %v23, %v24
  %v28 = vadd.f32 %v27, %v25
  %v29 = vadd.f32 %v28, %v26
  %v30 = vadd.f32 %v29, 0.0
  %v31 = vrot.slane %v30, 4
  %v32 = vadd.f32 %v30, %v31
  %v33 = vrot.slane %v32, 2
  %v34 = vadd.f32 %v32, %v33
  %v35 = vrot.slane %v34, 1
  %v36 = vadd.f32 %v34, %v35
  %37 = vst [vmem:[%s2] sm:$0x1] %v36
  // Predicated region
  $region10: #{hint_loss.1} parent=0 // pred_check
    _
  $region11: #{hint_loss.1} parent=0 // pred_check_branch
    %39 = sbr.rel (0) target = $region13
  $region12: #{hint_loss.1} parent=0 // pred_region
    _
  $region13: #{hint_loss.1} parent=0 // pred_fallthru
    _
  // Predicated region
  $region14: #{hint_loss.1} parent=0 // pred_check
    _
  $region15: #{hint_loss.1} parent=0 // pred_check_branch
    %41 = sbr.rel (0) target = $region17
  $region16: #{hint_loss.1} parent=0 // pred_region
    _
  $region17: #{hint_loss.1} parent=0 // pred_fallthru
    _

</llo_original>
